<compile_context>
chip_gen: v7x
topology: tpu7x:2x2x1
jax: 0.10.0
libtpu: 0.0.40
codegen_flags: <defaults>
</compile_context>

<pallas_src>
import functools
import math

import jax
import jax.numpy as jnp
from jax.experimental import pallas as pl
from jax.experimental.pallas import tpu as pltpu

_GRIDLESS_MAX_BATCH = 256          # below this: one gridless single-tile call
_VMEM_SOFT_CAP = 40 * 2**20        # per-step budget cap (v7x: 64 MiB physical)


def _round_up(x, m):
    return ((x + m - 1) // m) * m


# ----------------------------------------------------------------------------
# Fused kernel: chained  y = h @ W + b  [+ per-channel PReLU]  layers.
# ----------------------------------------------------------------------------
def _make_fused_kernel(layer_acts, mxu_dtype):
    """layer_acts: tuple[bool], one per (merged) linear layer; True -> PReLU.
    Ref layout: refs = (x, w0, b0[, a0], w1, b1[, a1], ..., o)."""

    def kernel(*refs):
        o_ref = refs[-1]
        h = refs[0][...].astype(jnp.float32)
        idx = 1
        for has_act in layer_acts:
            w = refs[idx][...]
            b = refs[idx + 1][...]
            idx += 2
            # MXU operands optionally bf16 (v6e/v7x fast path, halves W DMA);
            # accumulation and all elementwise math (bias, PReLU) stay in f32
            # (v5e has no bf16 VALU/EUP).
            y = jnp.dot(h.astype(mxu_dtype), w,
                        preferred_element_type=jnp.float32) + b
            if has_act:
                a = refs[idx][...]
                idx += 1
                y = jnp.where(y >= 0.0, y, a * y)
            h = y
        o_ref[...] = h.astype(o_ref.dtype)

    return kernel


@functools.lru_cache(maxsize=None)
def _single_buffer_mode():
    """Constant-index parameter blocks are DMA'd once; double-buffering them
    only wastes VMEM.  Probe pl.Buffered(1) once; fall back if unsupported."""
    try:
        def k(x_ref, w_ref, o_ref):
            o_ref[...] = x_ref[...] + w_ref[...]

        f = pl.pallas_call(
            k,
            out_shape=jax.ShapeDtypeStruct((16, 128), jnp.float32),
            grid=(2,),
            in_specs=[
                pl.BlockSpec((8, 128), lambda i: (i, 0)),
                pl.BlockSpec((8, 128), lambda i: (0, 0),
                             pipeline_mode=pl.Buffered(1)),
            ],
            out_specs=pl.BlockSpec((8, 128), lambda i: (i, 0)),
        )
        jax.block_until_ready(f(jnp.zeros((16, 128), jnp.float32),
                                jnp.ones((8, 128), jnp.float32)))
        return pl.Buffered(1)
    except Exception:   # version-dependent feature; safe fallback
        return None


def _param_specs(flat_params):
    mode = _single_buffer_mode()
    if mode is not None:
        return [pl.BlockSpec(p.shape, lambda i: (0, 0), pipeline_mode=mode)
                for p in flat_params]
    return [pl.BlockSpec(p.shape, lambda i: (0, 0)) for p in flat_params]


def _layer_out_widths(flat_params, layer_acts):
    widths, idx = [], 0
    for act in layer_acts:
        widths.append(int(flat_params[idx].shape[1]))
        idx += 3 if act else 2
    return widths


def _vmem_budget_bytes(tile, in_ch, flat_params, layer_acts):
    """Rough per-grid-step VMEM: double-buffered x/out tiles, parameters (x2 in
    case they stay double-buffered), one f32 temporary per unrolled layer."""
    widths = _layer_out_widths(flat_params, layer_acts)
    n_out = widths[-1]
    param_bytes = sum(int(p.size) * p.dtype.itemsize for p in flat_params)
    io_bytes = 2 * tile * in_ch * 4 + 2 * tile * n_out * 4
    inter_bytes = tile * sum(widths) * 4
    return io_bytes + 2 * param_bytes + inter_bytes


def _fused_call(x, flat_params, layer_acts, batch_tile):
    B, C = x.shape
    n_out = flat_params[-1].shape[1]          # last bias/alpha is (1, n_out)
    kernel = _make_fused_kernel(layer_acts, flat_params[0].dtype)

    if B <= _GRIDLESS_MAX_BATCH:
        # Small batch: gridless single-tile call, everything comfortably in VMEM.
        return pl.pallas_call(
            kernel, out_shape=jax.ShapeDtypeStruct((B, n_out), jnp.float32),
        )(x, *flat_params)

    # ---- pipelined batch-tiled path -----------------------------------------
    tile = max(128, _round_up(batch_tile, 128))
    if B < 2 * tile:
        # Keep >= 2 grid steps so ("parallel",) can shard over both v7x TCs.
        tile = max(128, _round_up(-(-B // 2), 128))
    # Shrink tile if the budget would exceed a conservative cap (v7x: 64 MiB
    # physical VMEM / 32 MiB default scoped limit).
    while tile > 256 and _vmem_budget_bytes(tile, C, flat_params,
                                            layer_acts) > _VMEM_SOFT_CAP:
        tile //= 2

    B_pad = _round_up(B, tile)
    if B_pad != B:
        # Pad the batch instead of dropping to a whole-batch VMEM-resident call.
        x = jnp.pad(x, ((0, B_pad - B), (0, 0)))
    grid = B_pad // tile

    budget = _vmem_budget_bytes(tile, C, flat_params, layer_acts)
    vmem_limit = int(min(max(32 * 2**20, 2 * budget), 64 * 2**20))

    in_specs = [pl.BlockSpec((tile, C), lambda i: (i, 0))]
    in_specs += _param_specs(flat_params)     # weights resident across the grid

    out = pl.pallas_call(
        kernel,
        out_shape=jax.ShapeDtypeStruct((B_pad, n_out), jnp.float32),
        grid=(grid,),
        in_specs=in_specs,
        out_specs=pl.BlockSpec((tile, n_out), lambda i: (i, 0)),
        compiler_params=pltpu.CompilerParams(
            dimension_semantics=("parallel",),
            vmem_limit_bytes=vmem_limit),
    )(x, *flat_params)
    return out[:B] if B_pad != B else out


@functools.partial(
    jax.jit,
    static_argnames=("layer_acts", "ch_features", "cat_out", "batch_tile"))
def mlp_features_embeddings_forward(
    x, flat_params, *, layer_acts, ch_features, cat_out=False, batch_tile=1024):
    # batch_tile default 1024 (sweep 1024-4096); kernel is HBM/overhead-bound.
    out = _fused_call(x, flat_params, layer_acts, batch_tile)  # (B, n_feat*ch)
    if cat_out:
        return out            # already unpadded & lane-packed -> no extra slice
    n_features = out.shape[1] // ch_features
    return [out[:, i * ch_features:(i + 1) * ch_features]
            for i in range(n_features)]


# ----------------------------------------------------------------------------
# Parameter construction (deterministic, in-script) and merging
# ----------------------------------------------------------------------------
def _mlp_dims(in_ch, deep, multy_coeff, out_ch):
    dims = [in_ch]
    ch = in_ch
    for _ in range(deep - 1):
        ch = int(ch * multy_coeff)
        dims.append(ch)
    dims.append(out_ch)
    return dims


def init_mlp_params(key, in_ch, deep, multy_coeff, out_ch):
    dims = _mlp_dims(in_ch, deep, multy_coeff, out_ch)
    params = []
    for i in range(len(dims) - 1):
        key, kw = jax.random.split(key)
        w = jax.random.normal(kw, (dims[i], dims[i + 1]), jnp.float32) / math.sqrt(dims[i])
        b = jnp.zeros((dims[i + 1],), jnp.float32)
        alpha = jnp.full((dims[i + 1],), 0.25, jnp.float32)   # PReLU default init
        params.append((w, b, alpha))
    return params, key


def _block_diag(mats):
    rows = sum(m.shape[0] for m in mats)
    cols = sum(m.shape[1] for m in mats)
    out = jnp.zeros((rows, cols), mats[0].dtype)
    r = c = 0
    for m in mats:
        out = out.at[r:r + m.shape[0], c:c + m.shape[1]].set(m)
        r += m.shape[0]
        c += m.shape[1]
    return out


def build_fused_params(emb_params, predict_params_list, param_dtype=jnp.float32):
    """Merge emb-net layers + the n_features predict nets into one flat layer
    stack for the fused kernel.  Predict-net layer 0 weights are concatenated
    along N, deeper layers are block-diagonal, so the final matmul directly
    produces the concatenated (B, n_features*ch_features) output (no padding).
    Weights are stored in `param_dtype` (bf16 for the v6e/v7x MXU fast path);
    biases / PReLU alphas stay f32.  Returns (flat_params, layer_acts, n_valid)."""
    layers = []   # (w, b, alpha_or_None, has_act)

    n_emb = len(emb_params)
    for li, (w, b, a) in enumerate(emb_params):
        has_act = li < n_emb - 1
        layers.append((w, b, a if has_act else None, has_act))

    n_pred = len(predict_params_list[0])
    for li in range(n_pred):
        ws = [p[li][0] for p in predict_params_list]
        bs = [p[li][1] for p in predict_params_list]
        als = [p[li][2] for p in predict_params_list]
        w = jnp.concatenate(ws, axis=1) if li == 0 else _block_diag(ws)
        b = jnp.concatenate(bs, axis=0)
        a = jnp.concatenate(als, axis=0)
        has_act = li < n_pred - 1
        layers.append((w, b, a if has_act else None, has_act))

    flat, acts = [], []
    for w, b, a, has_act in layers:
        flat.append(w.astype(param_dtype))                    # MXU operand
        flat.append(b.reshape(1, -1).astype(jnp.float32))     # hoisted reshape
        if has_act:
            flat.append(a.reshape(1, -1).astype(jnp.float32))  # only where used
        acts.append(has_act)
    n_valid = layers[-1][0].shape[1]
    return tuple(flat), tuple(acts), int(n_valid)


# ----------------------------------------------------------------------------
# Pure-JAX reference for correctness checking
# ----------------------------------------------------------------------------
def reference_forward(x, emb_params, predict_params_list, cat_out):
    def run_net(h, params):
        n = len(params)
        for li, (w, b, a) in enumerate(params):
            y = jnp.dot(h, w, precision=jax.lax.Precision.HIGHEST) + b
            if li < n - 1:
                y = jnp.where(y >= 0.0, y, a * y)
            h = y
        return h

    emb = run_net(x, emb_params)
    feats = [run_net(emb, p) for p in predict_params_list]
    return jnp.concatenate(feats, axis=-1) if cat_out else feats


if __name__ == "__main__":
    # Small config consistent with the module's __init__ signature.
    batch = 8
    in_ch = 16
    n_features = 3
    ch_features = 8
    deep_emb = 2
    deep_predict = 2
    emd_dim = 32
    emb_multy_coeff = 2.0
    predict_multy_coeff = 2.0

    key = jax.random.PRNGKey(0)
    key, kx = jax.random.split(key)
    x = jax.random.normal(kx, (batch, in_ch), jnp.float32)

    emb_params, key = init_mlp_params(key, in_ch, deep_emb, emb_multy_coeff, emd_dim)
    predict_params_list = []
    for _ in range(n_features):
        p, key = init_mlp_params(key, emd_dim, deep_predict, predict_multy_coeff,
                                 ch_features)
        predict_params_list.append(p)

    flat_params, layer_acts, n_valid = build_fused_params(emb_params, predict_params_list)
    assert n_valid == n_features * ch_features

    # --- small batch (gridless single-tile path), cat_out=True ----------------
    out = mlp_features_embeddings_forward(
        x, flat_params, layer_acts=layer_acts, ch_features=ch_features, cat_out=True)
    out = jax.block_until_ready(out)
    ref = reference_forward(x, emb_params, predict_params_list, cat_out=True)
    assert out.shape == (batch, n_features * ch_features), out.shape
    assert jnp.all(jnp.isfinite(out))
    assert jnp.allclose(out, ref, rtol=1e-2, atol=1e-2), float(jnp.max(jnp.abs(out - ref)))

    # --- cat_out=False returns a list of per-feature tensors ------------------
    feats = mlp_features_embeddings_forward(
        x, flat_params, layer_acts=layer_acts, ch_features=ch_features, cat_out=False)
    feats = jax.block_until_ready(feats)
    assert len(feats) == n_features
    assert all(f.shape == (batch, ch_features) for f in feats)
    assert jnp.allclose(jnp.concatenate(feats, axis=-1), ref, rtol=1e-2, atol=1e-2)

    # --- large divisible batch: pipelined grid (4096 / 1024 = 4 tiles) --------
    key, kx2 = jax.random.split(key)
    x_big = jax.random.normal(kx2, (4096, in_ch), jnp.float32)
    out_big = mlp_features_embeddings_forward(
        x_big, flat_params, layer_acts=layer_acts, ch_features=ch_features,
        cat_out=True, batch_tile=1024)
    out_big = jax.block_until_ready(out_big)
    ref_big = reference_forward(x_big, emb_params, predict_params_list, cat_out=True)
    assert out_big.shape == (4096, n_features * ch_features)
    assert jnp.allclose(out_big, ref_big, rtol=1e-2, atol=1e-2), \
        float(jnp.max(jnp.abs(out_big - ref_big)))

    # --- non-divisible batch: padded >=2-step grid, never whole-batch VMEM ----
    key, kx3 = jax.random.split(key)
    x_odd = jax.random.normal(kx3, (1000, in_ch), jnp.float32)
    out_odd = mlp_features_embeddings_forward(
        x_odd, flat_params, layer_acts=layer_acts, ch_features=ch_features,
        cat_out=True, batch_tile=1024)
    out_odd = jax.block_until_ready(out_odd)
    ref_odd = reference_forward(x_odd, emb_params, predict_params_list, cat_out=True)
    assert out_odd.shape == (1000, n_features * ch_features)
    assert jnp.allclose(out_odd, ref_odd, rtol=1e-2, atol=1e-2)

    # --- optional bf16 MXU operands (v6e/v7x fast path), f32 elementwise ------
    flat_bf16, acts_bf16, _ = build_fused_params(
        emb_params, predict_params_list, param_dtype=jnp.bfloat16)
    out_bf16 = mlp_features_embeddings_forward(
        x_big, flat_bf16, layer_acts=acts_bf16, ch_features=ch_features,
        cat_out=True, batch_tile=1024)
    out_bf16 = jax.block_until_ready(out_bf16)
    assert jnp.all(jnp.isfinite(out_bf16))
    assert jnp.allclose(out_bf16, ref_big, rtol=5e-2, atol=5e-2), \
        float(jnp.max(jnp.abs(out_bf16 - ref_big)))

    print("KERNEL_OK")
</pallas_src>

<mosaic_0001>
module attributes {stable_mosaic.version = 11 : i64} {
  func.func @kernel(%arg0: memref<8x16xf32, #tpu.memory_space<vmem>>, %arg1: memref<16x32xf32, #tpu.memory_space<vmem>>, %arg2: memref<1x32xf32, #tpu.memory_space<vmem>>, %arg3: memref<1x32xf32, #tpu.memory_space<vmem>>, %arg4: memref<32x32xf32, #tpu.memory_space<vmem>>, %arg5: memref<1x32xf32, #tpu.memory_space<vmem>>, %arg6: memref<32x192xf32, #tpu.memory_space<vmem>>, %arg7: memref<1x192xf32, #tpu.memory_space<vmem>>, %arg8: memref<1x192xf32, #tpu.memory_space<vmem>>, %arg9: memref<192x24xf32, #tpu.memory_space<vmem>>, %arg10: memref<1x24xf32, #tpu.memory_space<vmem>>, %arg11: memref<8x24xf32, #tpu.memory_space<vmem>>) attributes {dimension_semantics = [], scalar_prefetch = 0 : i64, scratch_operands = 0 : i64, tpu.core_type = #tpu.core_type<tc>} {
    %c0 = arith.constant 0 : index
    %c0_0 = arith.constant 0 : index
    %0 = vector.load %arg0[%c0, %c0_0] : memref<8x16xf32, #tpu.memory_space<vmem>>, vector<8x16xf32>
    %c0_1 = arith.constant 0 : index
    %c0_2 = arith.constant 0 : index
    %1 = vector.load %arg1[%c0_1, %c0_2] : memref<16x32xf32, #tpu.memory_space<vmem>>, vector<16x32xf32>
    %c0_3 = arith.constant 0 : index
    %c0_4 = arith.constant 0 : index
    %2 = vector.load %arg2[%c0_3, %c0_4] : memref<1x32xf32, #tpu.memory_space<vmem>>, vector<1x32xf32>
    %cst = arith.constant dense<0.000000e+00> : vector<8x32xf32>
    %3 = tpu.matmul %0, %1, %cst {dimension_numbers = #tpu.dot_dimension_numbers<[1], [0], [0], [1], [0, 0, 1, 1], [], []>} : vector<8x16xf32>, vector<16x32xf32>, vector<8x32xf32> -> vector<8x32xf32>
    %4 = vector.broadcast %2 : vector<1x32xf32> to vector<8x32xf32>
    %5 = arith.addf %3, %4 : vector<8x32xf32>
    %c0_5 = arith.constant 0 : index
    %c0_6 = arith.constant 0 : index
    %6 = vector.load %arg3[%c0_5, %c0_6] : memref<1x32xf32, #tpu.memory_space<vmem>>, vector<1x32xf32>
    %cst_7 = arith.constant 0.000000e+00 : f32
    %7 = vector.broadcast %cst_7 : f32 to vector<8x32xf32>
    %8 = arith.cmpf oge, %5, %7 : vector<8x32xf32>
    %9 = vector.broadcast %6 : vector<1x32xf32> to vector<8x32xf32>
    %10 = arith.mulf %9, %5 : vector<8x32xf32>
    %11 = arith.select %8, %5, %10 : vector<8x32xi1>, vector<8x32xf32>
    %c0_8 = arith.constant 0 : index
    %c0_9 = arith.constant 0 : index
    %12 = vector.load %arg4[%c0_8, %c0_9] : memref<32x32xf32, #tpu.memory_space<vmem>>, vector<32x32xf32>
    %c0_10 = arith.constant 0 : index
    %c0_11 = arith.constant 0 : index
    %13 = vector.load %arg5[%c0_10, %c0_11] : memref<1x32xf32, #tpu.memory_space<vmem>>, vector<1x32xf32>
    %cst_12 = arith.constant dense<0.000000e+00> : vector<8x32xf32>
    %14 = tpu.matmul %11, %12, %cst_12 {dimension_numbers = #tpu.dot_dimension_numbers<[1], [0], [0], [1], [0, 0, 1, 1], [], []>} : vector<8x32xf32>, vector<32x32xf32>, vector<8x32xf32> -> vector<8x32xf32>
    %15 = vector.broadcast %13 : vector<1x32xf32> to vector<8x32xf32>
    %16 = arith.addf %14, %15 : vector<8x32xf32>
    %c0_13 = arith.constant 0 : index
    %c0_14 = arith.constant 0 : index
    %17 = vector.load %arg6[%c0_13, %c0_14] : memref<32x192xf32, #tpu.memory_space<vmem>>, vector<32x192xf32>
    %c0_15 = arith.constant 0 : index
    %c0_16 = arith.constant 0 : index
    %18 = vector.load %arg7[%c0_15, %c0_16] : memref<1x192xf32, #tpu.memory_space<vmem>>, vector<1x192xf32>
    %cst_17 = arith.constant dense<0.000000e+00> : vector<8x192xf32>
    %19 = tpu.matmul %16, %17, %cst_17 {dimension_numbers = #tpu.dot_dimension_numbers<[1], [0], [0], [1], [0, 0, 1, 1], [], []>} : vector<8x32xf32>, vector<32x192xf32>, vector<8x192xf32> -> vector<8x192xf32>
    %20 = vector.broadcast %18 : vector<1x192xf32> to vector<8x192xf32>
    %21 = arith.addf %19, %20 : vector<8x192xf32>
    %c0_18 = arith.constant 0 : index
    %c0_19 = arith.constant 0 : index
    %22 = vector.load %arg8[%c0_18, %c0_19] : memref<1x192xf32, #tpu.memory_space<vmem>>, vector<1x192xf32>
    %cst_20 = arith.constant 0.000000e+00 : f32
    %23 = vector.broadcast %cst_20 : f32 to vector<8x192xf32>
    %24 = arith.cmpf oge, %21, %23 : vector<8x192xf32>
    %25 = vector.broadcast %22 : vector<1x192xf32> to vector<8x192xf32>
    %26 = arith.mulf %25, %21 : vector<8x192xf32>
    %27 = arith.select %24, %21, %26 : vector<8x192xi1>, vector<8x192xf32>
    %c0_21 = arith.constant 0 : index
    %c0_22 = arith.constant 0 : index
    %28 = vector.load %arg9[%c0_21, %c0_22] : memref<192x24xf32, #tpu.memory_space<vmem>>, vector<192x24xf32>
    %c0_23 = arith.constant 0 : index
    %c0_24 = arith.constant 0 : index
    %29 = vector.load %arg10[%c0_23, %c0_24] : memref<1x24xf32, #tpu.memory_space<vmem>>, vector<1x24xf32>
    %cst_25 = arith.constant dense<0.000000e+00> : vector<8x24xf32>
    %30 = tpu.matmul %27, %28, %cst_25 {dimension_numbers = #tpu.dot_dimension_numbers<[1], [0], [0], [1], [0, 0, 1, 1], [], []>} : vector<8x192xf32>, vector<192x24xf32>, vector<8x24xf32> -> vector<8x24xf32>
    %31 = vector.broadcast %29 : vector<1x24xf32> to vector<8x24xf32>
    %32 = arith.addf %30, %31 : vector<8x24xf32>
    %c0_26 = arith.constant 0 : index
    %c0_27 = arith.constant 0 : index
    %33 = vector.load %arg11[%c0_26, %c0_27] : memref<8x24xf32, #tpu.memory_space<vmem>>, vector<8x24xf32>
    tpu.vector_store %arg11[%c0_26, %c0_27], %32 {strides = array<i32>} : memref<8x24xf32, #tpu.memory_space<vmem>>, vector<8x24xf32>,
    return
  }
}

</mosaic_0001>

<llo_original>
// kernel: mlp_features_embeddings_forward.1
$region0: #{mlp_features_embeddings_forward.1}
  #allocation0 [shape = 'u32[]', space=smem, size = 0x4, offset = 0x4, fixed_abs, tag = 'smem constant byte address 0x4 - core index']
  #allocation1 [shape = 'u32[144,128]{1,0:T(1,128)}', space=vmem, size = 0x12000, scoped, tag = 'internal scratch']
  %s0 = inlined_call_operand.vmem [shape: f32[8,16], index: 0, kind: input, shape index: {}]
  %s1 = inlined_call_operand.vmem [shape: f32[16,32], index: 1, kind: input, shape index: {}]
  %s2 = inlined_call_operand.vmem [shape: f32[1,32], index: 2, kind: input, shape index: {}]
  %s3 = inlined_call_operand.vmem [shape: f32[1,32], index: 3, kind: input, shape index: {}]
  %s4 = inlined_call_operand.vmem [shape: f32[32,32], index: 4, kind: input, shape index: {}]
  %s5 = inlined_call_operand.vmem [shape: f32[1,32], index: 5, kind: input, shape index: {}]
  %s6 = inlined_call_operand.vmem [shape: f32[32,192], index: 6, kind: input, shape index: {}]
  %s7 = inlined_call_operand.vmem [shape: f32[1,192], index: 7, kind: input, shape index: {}]
  %s8 = inlined_call_operand.vmem [shape: f32[1,192], index: 8, kind: input, shape index: {}]
  %s9 = inlined_call_operand.vmem [shape: f32[192,24], index: 9, kind: input, shape index: {}]
  %s10 = inlined_call_operand.vmem [shape: f32[1,24], index: 10, kind: input, shape index: {}]
  %s11 = inlined_call_operand.hbm [shape: f32[8,24], index: 11, kind: output, shape index: {}]
  %s12 = sld [smem:[#allocation0]]
  $region54: #{mlp_features_embeddings_forward.1} parent=0
    _
  %s14 = ssub.s32 1, %s12
  %s15 = scalar_select 0, %s14, %s12
  $region1: #{mlp_features_embeddings_forward.1} parent=0
    #allocation2 [shape = 'u8[4096]{0}', space=vmem, size = 0x1000, scoped, tag = 'output window, operand 0, single buffered']
    #allocation3 [shape = 's32[1]{0}', space=sflag, size = 0x4, scoped, tag = 'scoped memory for mlp_features_embeddings_forward.1']
    %16 = vsyncpa [#allocation3], 0
    // Predicated region
    $region2: #{mlp_features_embeddings_forward.1} parent=1 // pred_check
      _
    $region3: #{mlp_features_embeddings_forward.1} parent=1 // pred_check_branch
      %18 = sbr.rel (0) target = $region5
    $region4: #{mlp_features_embeddings_forward.1} parent=1 // pred_region
      _
    $region5: #{mlp_features_embeddings_forward.1} parent=1 // pred_fallthru
      _
    // Predicated region
    $region6: #{mlp_features_embeddings_forward.1} parent=1 // pred_check
      _
    $region7: #{mlp_features_embeddings_forward.1} parent=1 // pred_check_branch
      %20 = sbr.rel (0) target = $region9
    $region8: #{mlp_features_embeddings_forward.1} parent=1 // pred_region
      _
    $region9: #{mlp_features_embeddings_forward.1} parent=1 // pred_fallthru
      _
    // Predicated region
    $region10: #{mlp_features_embeddings_forward.1} parent=1 // pred_check
      _
    $region11: #{mlp_features_embeddings_forward.1} parent=1 // pred_check_branch
      %22 = sbr.rel (0) target = $region13
    $region12: #{mlp_features_embeddings_forward.1} parent=1 // pred_region
      _
    $region13: #{mlp_features_embeddings_forward.1} parent=1 // pred_fallthru
      _
    // Predicated region
    $region14: #{mlp_features_embeddings_forward.1} parent=1 // pred_check
      _
    $region15: #{mlp_features_embeddings_forward.1} parent=1 // pred_check_branch
      %24 = sbr.rel (0) target = $region17
    $region16: #{mlp_features_embeddings_forward.1} parent=1 // pred_region
      _
    $region17: #{mlp_features_embeddings_forward.1} parent=1 // pred_fallthru
      _
    // Predicated region
    $region18: #{mlp_features_embeddings_forward.1} parent=1 // pred_check
      _
    $region19: #{mlp_features_embeddings_forward.1} parent=1 // pred_check_branch
      %26 = sbr.rel (0) target = $region21
    $region20: #{mlp_features_embeddings_forward.1} parent=1 // pred_region
      _
    $region21: #{mlp_features_embeddings_forward.1} parent=1 // pred_fallthru
      _
    // Predicated region
    $region22: #{mlp_features_embeddings_forward.1} parent=1 // pred_check
      _
    $region23: #{mlp_features_embeddings_forward.1} parent=1 // pred_check_branch
      %28 = sbr.rel (0) target = $region25
    $region24: #{mlp_features_embeddings_forward.1} parent=1 // pred_region
      _
    $region25: #{mlp_features_embeddings_forward.1} parent=1 // pred_fallthru
      _
    // Predicated region
    $region26: #{mlp_features_embeddings_forward.1} parent=1 // pred_check
      _
    $region27: #{mlp_features_embeddings_forward.1} parent=1 // pred_check_branch
      %30 = sbr.rel (0) target = $region29
    $region28: #{mlp_features_embeddings_forward.1} parent=1 // pred_region
      _
    $region29: #{mlp_features_embeddings_forward.1} parent=1 // pred_fallthru
      _
    // Predicated region
    $region30: #{mlp_features_embeddings_forward.1} parent=1 // pred_check
      _
    $region31: #{mlp_features_embeddings_forward.1} parent=1 // pred_check_branch
      %32 = sbr.rel (0) target = $region33
    $region32: #{mlp_features_embeddings_forward.1} parent=1 // pred_region
      _
    $region33: #{mlp_features_embeddings_forward.1} parent=1 // pred_fallthru
      _
    // Predicated region
    $region34: #{mlp_features_embeddings_forward.1} parent=1 // pred_check
      _
    $region35: #{mlp_features_embeddings_forward.1} parent=1 // pred_check_branch
      %34 = sbr.rel (0) target = $region37
    $region36: #{mlp_features_embeddings_forward.1} parent=1 // pred_region
      _
    $region37: #{mlp_features_embeddings_forward.1} parent=1 // pred_fallthru
      _
    // Predicated region
    $region38: #{mlp_features_embeddings_forward.1} parent=1 // pred_check
      _
    $region39: #{mlp_features_embeddings_forward.1} parent=1 // pred_check_branch
      %36 = sbr.rel (0) target = $region41
    $region40: #{mlp_features_embeddings_forward.1} parent=1 // pred_region
      _
    $region41: #{mlp_features_embeddings_forward.1} parent=1 // pred_fallthru
      _
    // Predicated region
    $region42: #{mlp_features_embeddings_forward.1} parent=1 // pred_check
      _
    $region43: #{mlp_features_embeddings_forward.1} parent=1 // pred_check_branch
      %38 = sbr.rel (0) target = $region45
    $region44: #{mlp_features_embeddings_forward.1} parent=1 // pred_region
      _
    $region45: #{mlp_features_embeddings_forward.1} parent=1 // pred_fallthru
      _
    %v39 = vld [vmem:[%s0] sm:$0xff]
    %v40 = vld [vmem:[%s1] sm:$0xff]
    %v41 = vld [vmem:[%s1 + $0x8] sm:$0xff]
    %v42 = vld [vmem:[%s2] sm:$0x1]
    %v44 = vlaneseq
    %v45 = vshrl.u32 %v44, 7
    %v46 = vsub.s32 0, %v45
    %v47 = vrot.slane %v42, %v46
    %vm49 = vcmask 130048
    %v51 = vsel %vm49, %v39, 0
    %53 = vmatprep.subr.mxu0 0.0
    %54 = vmatpush1.msra.mxu0 %v40
    %55 = vmatprep.subr.mxu0 0.0
    %56 = vmatpush1.msra.mxu0 %v41
    %57 = vmatprep.subr.mxu0 0.0
    %58 = vmatpush1.msra.mxu0 0.0
    %59 = vmatprep.subr.mxu0 0.0
    %60 = vmatpush1.msra.mxu0 0.0
    %61 = vmatprep.subr.mxu0 0.0
    %62 = vmatpush1.msra.mxu0 0.0
    %63 = vmatprep.subr.mxu0 0.0
    %64 = vmatpush1.msra.mxu0 0.0
    %65 = vmatprep.subr.mxu0 0.0
    %66 = vmatpush1.msra.mxu0 0.0
    %67 = vmatprep.subr.mxu0 0.0
    %68 = vmatpush1.msra.mxu0 0.0
    %69 = vmatprep.subr.mxu0 0.0
    %70 = vmatpush1.msra.mxu0 0.0
    %71 = vmatprep.subr.mxu0 0.0
    %72 = vmatpush1.msra.mxu0 0.0
    %73 = vmatprep.subr.mxu0 0.0
    %74 = vmatpush1.msra.mxu0 0.0
    %75 = vmatprep.subr.mxu0 0.0
    %76 = vmatpush1.msra.mxu0 0.0
    %77 = vmatprep.subr.mxu0 0.0
    %78 = vmatpush1.msra.mxu0 0.0
    %79 = vmatprep.subr.mxu0 0.0
    %80 = vmatpush1.msra.mxu0 0.0
    %81 = vmatprep.subr.mxu0 0.0
    %82 = vmatpush1.msra.mxu0 0.0
    %83 = vmatprep.subr.mxu0 0.0
    %84 = vmatpush1.msra.mxu0 0.0
    %85 = vmatprep.subr.mxu0 0.0
    %86 = vmatpush1.msra.mxu0 0.0
    %87 = vmatprep.subr.mxu0 0.0
    %88 = vmatpush1.msra.mxu0 0.0
    %89 = vmatprep.subr.mxu0 0.0
    %90 = vmatpush1.msra.mxu0 0.0
    %91 = vmatprep.subr.mxu0 0.0
    %92 = vmatpush1.msra.mxu0 0.0
    %93 = vmatprep.subr.mxu0 0.0
    %94 = vmatpush1.msra.mxu0 0.0
    %95 = vmatprep.subr.mxu0 0.0
    %96 = vmatpush1.msra.mxu0 0.0
    %97 = vmatprep.subr.mxu0 0.0
    %98 = vmatpush1.msra.mxu0 0.0
    %99 = vmatprep.subr.mxu0 0.0
    %100 = vmatpush1.msra.mxu0 0.0
    %101 = vmatprep.subr.mxu0 0.0
    %102 = vmatpush1.msra.mxu0 0.0
    %103 = vmatprep.subr.mxu0 0.0
    %104 = vmatpush1.msra.mxu0 0.0
    %105 = vmatprep.subr.mxu0 0.0
    %106 = vmatpush1.msra.mxu0 0.0
    %107 = vmatprep.subr.mxu0 0.0
    %108 = vmatpush1.msra.mxu0 0.0
    %109 = vmatprep.subr.mxu0 0.0
    %110 = vmatpush1.msra.mxu0 0.0
    %111 = vmatprep.subr.mxu0 0.0
    %112 = vmatpush1.msra.mxu0 0.0
    %113 = vmatprep.subr.mxu0 0.0
    %114 = vmatpush1.msra.mxu0 0.0
    %115 = vmatprep.subr.mxu0 0.0
    %116 = vmatpush1.msra.mxu0 0.0
    %117 = vmatprep.mubr.f32.mxu0 0.0
    %118 = vmatmul.mubr.f32.gmra.mrb[0].mxu0 %v51
    %v119 = vpop.f32.mrb[0].mxu0
    %v120 = vadd.f32 %v47, %v119
    %v121 = vpop.f32.mrb[0].mxu0
    %122 = vdwg.mxu0
    %v123 = vld [vmem:[%s3] sm:$0x1]
    %vm124 = vcmp.ge.f32.partialorder %v120, 0.0
    %v126 = vlaneseq
    %v127 = vshrl.u32 %v126, 7
    %v128 = vsub.s32 0, %v127
    %v129 = vrot.slane %v123, %v128
    %v131 = vmul.f32 %v129, %v120
    %v132 = vsel %vm124, %v120, %v131
    %v133 = vld [vmem:[%s4] sm:$0xff]
    %v134 = vld [vmem:[%s4 + $0x8] sm:$0xff]
    %v135 = vld [vmem:[%s4 + $0x10] sm:$0xff]
    %v136 = vld [vmem:[%s4 + $0x18] sm:$0xff]
    %v137 = vld [vmem:[%s5] sm:$0x1]
    %v139 = vlaneseq
    %v140 = vshrl.u32 %v139, 7
    %v141 = vsub.s32 0, %v140
    %v142 = vrot.slane %v137, %v141
    %vm144 = vcmask 261120
    %v146 = vsel %vm144, %v132, 0
    %148 = vmatprep.subr.mxu0 0.0
    %149 = vmatpush1.msra.mxu0 %v133
    %150 = vmatprep.subr.mxu0 0.0
    %151 = vmatpush1.msra.mxu0 %v134
    %152 = vmatprep.subr.mxu0 0.0
    %153 = vmatpush1.msra.mxu0 %v135
    %154 = vmatprep.subr.mxu0 0.0
    %155 = vmatpush1.msra.mxu0 %v136
    %156 = vmatprep.subr.mxu0 0.0
    %157 = vmatpush1.msra.mxu0 0.0
    %158 = vmatprep.subr.mxu0 0.0
    %159 = vmatpush1.msra.mxu0 0.0
    %160 = vmatprep.subr.mxu0 0.0
    %161 = vmatpush1.msra.mxu0 0.0
    %162 = vmatprep.subr.mxu0 0.0
    %163 = vmatpush1.msra.mxu0 0.0
    %164 = vmatprep.subr.mxu0 0.0
    %165 = vmatpush1.msra.mxu0 0.0
    %166 = vmatprep.subr.mxu0 0.0
    %167 = vmatpush1.msra.mxu0 0.0
    %168 = vmatprep.subr.mxu0 0.0
    %169 = vmatpush1.msra.mxu0 0.0
    %170 = vmatprep.subr.mxu0 0.0
    %171 = vmatpush1.msra.mxu0 0.0
    %172 = vmatprep.subr.mxu0 0.0
    %173 = vmatpush1.msra.mxu0 0.0
    %174 = vmatprep.subr.mxu0 0.0
    %175 = vmatpush1.msra.mxu0 0.0
    %176 = vmatprep.subr.mxu0 0.0
    %177 = vmatpush1.msra.mxu0 0.0
    %178 = vmatprep.subr.mxu0 0.0
    %179 = vmatpush1.msra.mxu0 0.0
    %180 = vmatprep.subr.mxu0 0.0
    %181 = vmatpush1.msra.mxu0 0.0
    %182 = vmatprep.subr.mxu0 0.0
    %183 = vmatpush1.msra.mxu0 0.0
    %184 = vmatprep.subr.mxu0 0.0
    %185 = vmatpush1.msra.mxu0 0.0
    %186 = vmatprep.subr.mxu0 0.0
    %187 = vmatpush1.msra.mxu0 0.0
    %188 = vmatprep.subr.mxu0 0.0
    %189 = vmatpush1.msra.mxu0 0.0
    %190 = vmatprep.subr.mxu0 0.0
    %191 = vmatpush1.msra.mxu0 0.0
    %192 = vmatprep.subr.mxu0 0.0
    %193 = vmatpush1.msra.mxu0 0.0
    %194 = vmatprep.subr.mxu0 0.0
    %195 = vmatpush1.msra.mxu0 0.0
    %196 = vmatprep.subr.mxu0 0.0
    %197 = vmatpush1.msra.mxu0 0.0
    %198 = vmatprep.subr.mxu0 0.0
    %199 = vmatpush1.msra.mxu0 0.0
    %200 = vmatprep.subr.mxu0 0.0
    %201 = vmatpush1.msra.mxu0 0.0
    %202 = vmatprep.subr.mxu0 0.0
    %203 = vmatpush1.msra.mxu0 0.0
    %204 = vmatprep.subr.mxu0 0.0
    %205 = vmatpush1.msra.mxu0 0.0
    %206 = vmatprep.subr.mxu0 0.0
    %207 = vmatpush1.msra.mxu0 0.0
    %208 = vmatprep.subr.mxu0 0.0
    %209 = vmatpush1.msra.mxu0 0.0
    %210 = vmatprep.subr.mxu0 0.0
    %211 = vmatpush1.msra.mxu0 0.0
    %212 = vmatprep.mubr.f32.mxu0 0.0
    %213 = vmatmul.mubr.f32.gmra.mrb[0].mxu0 %v146
    %v214 = vpop.f32.mrb[0].mxu0
    %v215 = vadd.f32 %v142, %v214
    %v216 = vpop.f32.mrb[0].mxu0
    %217 = vdwg.mxu0
    %v218 = vld [vmem:[%s6] sm:$0xff]
    %v219 = vld [vmem:[%s6 + $0x8] sm:$0xff]
    %v220 = vld [vmem:[%s6 + $0x10] sm:$0xff]
    %v221 = vld [vmem:[%s6 + $0x18] sm:$0xff]
    %v222 = vld [vmem:[%s6 + $0x20] sm:$0xff]
    %v223 = vld [vmem:[%s6 + $0x28] sm:$0xff]
    %v224 = vld [vmem:[%s6 + $0x30] sm:$0xff]
    %v225 = vld [vmem:[%s6 + $0x38] sm:$0xff]
    %v226 = vld [vmem:[%s7] sm:$0x3]
    %v228 = vlaneseq
    %v229 = vshrl.u32 %v228, 7
    %v230 = vsub.s32 0, %v229
    %v231 = vrot.slane %v226, %v230
    %v232 = vlaneseq
    %v233 = vshrl.u32 %v232, 7
    %v234 = vsub.s32 1, %v233
    %v235 = vrot.slane %v226, %v234
    %v239 = vsel %vm144, %v215, 0
    %241 = vmatprep.subr.mxu0 %v219
    %242 = vmatpush1.msra.mxu0 %v218
    %243 = vmatprep.subr.mxu0 %v221
    %244 = vmatpush1.msra.mxu0 %v220
    %245 = vmatprep.subr.mxu0 %v223
    %246 = vmatpush1.msra.mxu0 %v222
    %247 = vmatprep.subr.mxu0 %v225
    %248 = vmatpush1.msra.mxu0 %v224
    %249 = vmatprep.subr.mxu0 0.0
    %250 = vmatpush1.msra.mxu0 0.0
    %251 = vmatprep.subr.mxu0 0.0
    %252 = vmatpush1.msra.mxu0 0.0
    %253 = vmatprep.subr.mxu0 0.0
    %254 = vmatpush1.msra.mxu0 0.0
    %255 = vmatprep.subr.mxu0 0.0
    %256 = vmatpush1.msra.mxu0 0.0
    %257 = vmatprep.subr.mxu0 0.0
    %258 = vmatpush1.msra.mxu0 0.0
    %259 = vmatprep.subr.mxu0 0.0
    %260 = vmatpush1.msra.mxu0 0.0
    %261 = vmatprep.subr.mxu0 0.0
    %262 = vmatpush1.msra.mxu0 0.0
    %263 = vmatprep.subr.mxu0 0.0
    %264 = vmatpush1.msra.mxu0 0.0
    %265 = vmatprep.subr.mxu0 0.0
    %266 = vmatpush1.msra.mxu0 0.0
    %267 = vmatprep.subr.mxu0 0.0
    %268 = vmatpush1.msra.mxu0 0.0
    %269 = vmatprep.subr.mxu0 0.0
    %270 = vmatpush1.msra.mxu0 0.0
    %271 = vmatprep.subr.mxu0 0.0
    %272 = vmatpush1.msra.mxu0 0.0
    %273 = vmatprep.subr.mxu0 0.0
    %274 = vmatpush1.msra.mxu0 0.0
    %275 = vmatprep.subr.mxu0 0.0
    %276 = vmatpush1.msra.mxu0 0.0
    %277 = vmatprep.subr.mxu0 0.0
    %278 = vmatpush1.msra.mxu0 0.0
    %279 = vmatprep.subr.mxu0 0.0
    %280 = vmatpush1.msra.mxu0 0.0
    %281 = vmatprep.subr.mxu0 0.0
    %282 = vmatpush1.msra.mxu0 0.0
    %283 = vmatprep.subr.mxu0 0.0
    %284 = vmatpush1.msra.mxu0 0.0
    %285 = vmatprep.subr.mxu0 0.0
    %286 = vmatpush1.msra.mxu0 0.0
    %287 = vmatprep.subr.mxu0 0.0
    %288 = vmatpush1.msra.mxu0 0.0
    %289 = vmatprep.subr.mxu0 0.0
    %290 = vmatpush1.msra.mxu0 0.0
    %291 = vmatprep.subr.mxu0 0.0
    %292 = vmatpush1.msra.mxu0 0.0
    %293 = vmatprep.subr.mxu0 0.0
    %294 = vmatpush1.msra.mxu0 0.0
    %295 = vmatprep.subr.mxu0 0.0
    %296 = vmatpush1.msra.mxu0 0.0
    %297 = vmatprep.subr.mxu0 0.0
    %298 = vmatpush1.msra.mxu0 0.0
    %299 = vmatprep.subr.mxu0 0.0
    %300 = vmatpush1.msra.mxu0 0.0
    %301 = vmatprep.subr.mxu0 0.0
    %302 = vmatpush1.msra.mxu0 0.0
    %303 = vmatprep.subr.mxu0 0.0
    %304 = vmatpush1.msra.mxu0 0.0
    %305 = vmatprep.mubr.f32.mxu0 0.0
    %306 = vmatmul.mubr.f32.gmra.mrb[0].mxu0 %v239
    %v307 = vpop.f32.mrb[0].mxu0
    %v308 = vadd.f32 %v231, %v307
    %v309 = vpop.f32.mrb[0].mxu0
    %v310 = vadd.f32 %v235, %v309
    %311 = vdwg.mxu0
    %v312 = vld [vmem:[%s8] sm:$0x3]
    %vm313 = vcmp.ge.f32.partialorder %v308, 0.0
    %vm314 = vcmp.ge.f32.partialorder %v310, 0.0
    %v316 = vlaneseq
    %v317 = vshrl.u32 %v316, 7
    %v318 = vsub.s32 0, %v317
    %v319 = vrot.slane %v312, %v318
    %v320 = vlaneseq
    %v321 = vshrl.u32 %v320, 7
    %v322 = vsub.s32 1, %v321
    %v323 = vrot.slane %v312, %v322
    %v326 = vmul.f32 %v319, %v308
    %v327 = vmul.f32 %v323, %v310
    %v328 = vsel %vm313, %v308, %v326
    %v329 = vsel %vm314, %v310, %v327
    %v330 = vld [vmem:[%s9] sm:$0xff]
    %v331 = vld [vmem:[%s9 + $0x8] sm:$0xff]
    %v332 = vld [vmem:[%s9 + $0x10] sm:$0xff]
    %v333 = vld [vmem:[%s9 + $0x18] sm:$0xff]
    %v334 = vld [vmem:[%s9 + $0x20] sm:$0xff]
    %v335 = vld [vmem:[%s9 + $0x28] sm:$0xff]
    %v336 = vld [vmem:[%s9 + $0x30] sm:$0xff]
    %v337 = vld [vmem:[%s9 + $0x38] sm:$0xff]
    %v338 = vld [vmem:[%s9 + $0x40] sm:$0xff]
    %v339 = vld [vmem:[%s9 + $0x48] sm:$0xff]
    %v340 = vld [vmem:[%s9 + $0x50] sm:$0xff]
    %v341 = vld [vmem:[%s9 + $0x58] sm:$0xff]
    %v342 = vld [vmem:[%s9 + $0x60] sm:$0xff]
    %v343 = vld [vmem:[%s9 + $0x68] sm:$0xff]
    %v344 = vld [vmem:[%s9 + $0x70] sm:$0xff]
    %v345 = vld [vmem:[%s9 + $0x78] sm:$0xff]
    %v346 = vld [vmem:[%s9 + $0x80] sm:$0xff]
    %v347 = vld [vmem:[%s9 + $0x88] sm:$0xff]
    %v348 = vld [vmem:[%s9 + $0x90] sm:$0xff]
    %v349 = vld [vmem:[%s9 + $0x98] sm:$0xff]
    %v350 = vld [vmem:[%s9 + $0xa0] sm:$0xff]
    %v351 = vld [vmem:[%s9 + $0xa8] sm:$0xff]
    %v352 = vld [vmem:[%s9 + $0xb0] sm:$0xff]
    %v353 = vld [vmem:[%s9 + $0xb8] sm:$0xff]
    %v354 = vld [vmem:[%s10] sm:$0x1]
    %v356 = vlaneseq
    %v357 = vshrl.u32 %v356, 7
    %v358 = vsub.s32 0, %v357
    %v359 = vrot.slane %v354, %v358
    %vm361 = vcmask 523264
    %v363 = vsel %vm361, %v329, 0
    %365 = vmatprep.subr.mxu0 0.0
    %366 = vmatpush1.msra.mxu0 %v330
    %367 = vmatprep.subr.mxu0 0.0
    %368 = vmatpush1.msra.mxu0 %v331
    %369 = vmatprep.subr.mxu0 0.0
    %370 = vmatpush1.msra.mxu0 %v332
    %371 = vmatprep.subr.mxu0 0.0
    %372 = vmatpush1.msra.mxu0 %v333
    %373 = vmatprep.subr.mxu0 0.0
    %374 = vmatpush1.msra.mxu0 %v334
    %375 = vmatprep.subr.mxu0 0.0
    %376 = vmatpush1.msra.mxu0 %v335
    %377 = vmatprep.subr.mxu0 0.0
    %378 = vmatpush1.msra.mxu0 %v336
    %379 = vmatprep.subr.mxu0 0.0
    %380 = vmatpush1.msra.mxu0 %v337
    %381 = vmatprep.subr.mxu0 0.0
    %382 = vmatpush1.msra.mxu0 %v338
    %383 = vmatprep.subr.mxu0 0.0
    %384 = vmatpush1.msra.mxu0 %v339
    %385 = vmatprep.subr.mxu0 0.0
    %386 = vmatpush1.msra.mxu0 %v340
    %387 = vmatprep.subr.mxu0 0.0
    %388 = vmatpush1.msra.mxu0 %v341
    %389 = vmatprep.subr.mxu0 0.0
    %390 = vmatpush1.msra.mxu0 %v342
    %391 = vmatprep.subr.mxu0 0.0
    %392 = vmatpush1.msra.mxu0 %v343
    %393 = vmatprep.subr.mxu0 0.0
    %394 = vmatpush1.msra.mxu0 %v344
    %395 = vmatprep.subr.mxu0 0.0
    %396 = vmatpush1.msra.mxu0 %v345
    %397 = vmatprep.subr.mxu0 0.0
    %398 = vmatpush1.msra.mxu0 %v346
    %399 = vmatprep.subr.mxu0 0.0
    %400 = vmatpush1.msra.mxu0 %v347
    %401 = vmatprep.subr.mxu0 0.0
    %402 = vmatpush1.msra.mxu0 %v348
    %403 = vmatprep.subr.mxu0 0.0
    %404 = vmatpush1.msra.mxu0 %v349
    %405 = vmatprep.subr.mxu0 0.0
    %406 = vmatpush1.msra.mxu0 %v350
    %407 = vmatprep.subr.mxu0 0.0
    %408 = vmatpush1.msra.mxu0 %v351
    %409 = vmatprep.subr.mxu0 0.0
    %410 = vmatpush1.msra.mxu0 %v352
    %411 = vmatprep.subr.mxu0 0.0
    %412 = vmatpush1.msra.mxu0 %v353
    %413 = vmatprep.subr.mxu0 0.0
    %414 = vmatpush1.msra.mxu0 0.0
    %415 = vmatprep.subr.mxu0 0.0
    %416 = vmatpush1.msra.mxu0 0.0
    %417 = vmatprep.subr.mxu0 0.0
    %418 = vmatpush1.msra.mxu0 0.0
    %419 = vmatprep.subr.mxu0 0.0
    %420 = vmatpush1.msra.mxu0 0.0
    %421 = vmatprep.subr.mxu0 0.0
    %422 = vmatpush1.msra.mxu0 0.0
    %423 = vmatprep.subr.mxu0 0.0
    %424 = vmatpush1.msra.mxu0 0.0
    %425 = vmatprep.subr.mxu0 0.0
    %426 = vmatpush1.msra.mxu0 0.0
    %427 = vmatprep.subr.mxu0 0.0
    %428 = vmatpush1.msra.mxu0 0.0
    %429 = vmatprep.mubr.f32.mxu0 %v363
    %430 = vmatmul.mubr.f32.gmra.mrb[0].mxu0 %v328
    %v431 = vpop.f32.mrb[0].mxu0
    %v432 = vadd.f32 %v359, %v431
    %v433 = vpop.f32.mrb[0].mxu0
    %434 = vdwg.mxu0
    %vm435 = vcmask 195584
    %436 = vst.msk [vmem:[#allocation2] sm:$0xff] %vm435, %v432
    // Predicated region
    $region46: #{mlp_features_embeddings_forward.1} parent=1 // pred_check
      _
    $region47: #{mlp_features_embeddings_forward.1} parent=1 // pred_check_branch
      %438 = sbr.rel (0) target = $region49
    $region48: #{mlp_features_embeddings_forward.1} parent=1 // pred_region
      %s440 = ssub.s32 128, 128
      %441 = vsyncadd [#allocation3], %s440
      %s443 = sshll.u32 [#allocation2], 4
      %s444 = int_to_ptr.vmem [resolvable:$true] %s443
      %446 = dma.vmem_to_hbm [thread:$0]  %s444, 128, %s11, [#allocation3]
    $region49: #{mlp_features_embeddings_forward.1} parent=1 // pred_fallthru
      _
    // Predicated region
    $region50: #{mlp_features_embeddings_forward.1} parent=1 // pred_check
      _
    $region51: #{mlp_features_embeddings_forward.1} parent=1 // pred_check_branch
      %448 = sbr.rel (0) target = $region53
    $region52: #{mlp_features_embeddings_forward.1} parent=1 // pred_region
      %449 = dma.done [#allocation3], 128
    $region53: #{mlp_features_embeddings_forward.1} parent=1 // pred_fallthru
      _
    %450 = vsyncpa [#allocation3], 1

</llo_original>
